<compile_context>
chip_gen: v7x
topology: tpu7x:2x2x1
jax: 0.10.0
libtpu: 0.0.40
codegen_flags: <defaults>
</compile_context>

<pallas_src>
import functools
import math

import jax
import jax.numpy as jnp
from jax import lax
from jax.experimental import pallas as pl
from jax.experimental.pallas import tpu as pltpu

MAX_ROW_TILE = 128   # rows per grid step (always a multiple of 8)
MAX_T_TILE = 16      # time steps produced per grid step

# Hardware PRNG only lowers on real TPU; keep the software hash elsewhere.
_ON_TPU = jax.default_backend() == "tpu"


def _fmix32(h):
    """murmur3 finalizer: 32-bit avalanche hash (uint32 in, uint32 out)."""
    h = h ^ (h >> 16)
    h = h * jnp.uint32(0x85EBCA6B)
    h = h ^ (h >> 13)
    h = h * jnp.uint32(0xC2B2AE35)
    h = h ^ (h >> 16)
    return h


def _signed_poisson_kernel(seed_ref, x_ref, o_ref, *, t_tile, rate, k_max,
                           use_hw_prng):
    r = pl.program_id(0)          # row-tile index
    t = pl.program_id(1)          # time-tile index
    tr, lanes = x_ref.shape

    x = x_ref[...]                                          # (TR, LANES) f32

    # ---- time-invariant setup: computed once per grid step ------------------
    lam = jnp.float32(rate) * jnp.abs(x)
    sign_bits = lax.bitcast_convert_type(x, jnp.uint32) & jnp.uint32(0x80000000)

    # Poisson CDF thresholds in the 24-bit integer domain:
    #   thr[i] = floor(P(X <= i) * 2^24),  i = 0 .. k_max-1
    # The per-step count is  k = #{ i : top24(bits) > thr[i] }.
    two24 = jnp.float32(1 << 24)
    p = jnp.exp(-lam)
    cdf = p
    thr = []
    for i in range(k_max):
        thr.append((cdf * two24).astype(jnp.int32))
        if i + 1 < k_max:
            p = p * (lam * jnp.float32(1.0 / (i + 1)))
            cdf = cdf + p

    if use_hw_prng:
        # Deterministic per (seed, row-tile, time-tile) regardless of which
        # TensorCore runs this grid point.
        pltpu.prng_seed(seed_ref[0], r, t)
    else:
        # Portable counter-based fallback (interpret mode / non-TPU backends).
        row_iota = lax.broadcasted_iota(jnp.int32, x.shape, 0)
        col_iota = lax.broadcasted_iota(jnp.int32, x.shape, 1)
        elem_id = (r * tr + row_iota) * lanes + col_iota
        elem_key = (lax.bitcast_convert_type(elem_id, jnp.uint32)
                    * jnp.uint32(0x27D4EB2F))
        seed_key = seed_ref[0].astype(jnp.uint32)
        base_t = (t * t_tile).astype(jnp.uint32)

    # ---- per-time-step work (fully unrolled, minimal VALU ops) ---------------
    for tt in range(t_tile):
        if use_hw_prng:
            raw = pltpu.prng_random_bits(x.shape)
            bits = raw if raw.dtype == jnp.uint32 else lax.bitcast_convert_type(
                raw, jnp.uint32)
        else:
            step_key = seed_key + (base_t + jnp.uint32(tt)) * jnp.uint32(0x9E3779B9)
            bits = _fmix32(elem_key + step_key)

        bits24 = lax.bitcast_convert_type(bits >> 8, jnp.int32)   # in [0, 2^24)

        k = (bits24 > thr[0]).astype(jnp.int32)
        for i in range(1, k_max):
            k = k + (bits24 > thr[i]).astype(jnp.int32)

        # sign(x) * k via sign-bit injection (single OR per element per step)
        kf = k.astype(jnp.float32)
        o_ref[tt] = lax.bitcast_convert_type(
            lax.bitcast_convert_type(kf, jnp.uint32) | sign_bits, jnp.float32)


def _k_max_for_rate(lam_max: float) -> int:
    """Smallest K such that the Poisson(lam_max) tail P(X > K) < 2^-24."""
    lam = max(float(lam_max), 1e-6)
    p = math.exp(-lam)
    cdf = p
    k = 0
    while (1.0 - cdf) > 2.0 ** -24 and k < 24:
        k += 1
        p *= lam / k
        cdf += p
    return max(k, 1)


def _choose_layout(m: int):
    """Pick (lanes, rows) for the flattened input.  Prefer a split with zero
    padding (m == lanes*rows and rows % 8 == 0); otherwise pad."""
    for cand in (512, 256, 128):
        if m % cand == 0 and (m // cand) % 8 == 0:
            return cand, m // cand
    lanes = 512
    rows = -(-m // lanes)
    rows = -(-rows // 8) * 8
    return lanes, rows


def _choose_t_tile(seq_length: int) -> int:
    """Largest divisor of seq_length <= MAX_T_TILE; pad only if that divisor
    would be too small to amortize the per-tile setup."""
    best = 1
    for d in range(1, min(MAX_T_TILE, seq_length) + 1):
        if seq_length % d == 0:
            best = d
    if best == seq_length or best * 2 >= MAX_T_TILE:
        return best                      # no time padding needed
    return MAX_T_TILE                    # pad time axis, slice afterwards


@functools.partial(jax.jit, static_argnames=("seq_length", "f_max", "dt"))
def signed_poisson_encode(x, seq_length: int, seed=0,
                          f_max: float = 100.0, dt: float = 0.001):
    orig_shape = tuple(x.shape)
    xf = jnp.asarray(x, jnp.float32).reshape(-1)
    m = int(xf.shape[0])

    lanes, rows = _choose_layout(m)
    if rows <= MAX_ROW_TILE:
        tr = rows
        n_row_tiles = 1
    else:
        tr = MAX_ROW_TILE
        n_row_tiles = -(-rows // tr)
    rows_p = n_row_tiles * tr
    padded = rows_p * lanes

    t_tile = _choose_t_tile(int(seq_length))
    n_t_tiles = -(-int(seq_length) // t_tile)
    t_p = n_t_tiles * t_tile

    if padded == m:
        x2d = xf.reshape(rows_p, lanes)
    else:
        x2d = jnp.zeros((padded,), jnp.float32).at[:m].set(xf).reshape(rows_p, lanes)

    rate = float(dt) * float(f_max)
    k_max = _k_max_for_rate(rate)                # assumes |x| <= 1 (module contract)
    seed_arr = jnp.asarray(seed, jnp.int32).reshape((1,))

    kernel = functools.partial(
        _signed_poisson_kernel,
        t_tile=t_tile, rate=rate, k_max=k_max, use_hw_prng=_ON_TPU)

    out = pl.pallas_call(
        kernel,
        out_shape=jax.ShapeDtypeStruct((t_p, rows_p, lanes), jnp.float32),
        grid_spec=pltpu.PrefetchScalarGridSpec(
            num_scalar_prefetch=1,
            grid=(n_row_tiles, n_t_tiles),
            in_specs=[pl.BlockSpec((tr, lanes), lambda r, t, s: (r, 0))],
            out_specs=pl.BlockSpec((t_tile, tr, lanes), lambda r, t, s: (t, r, 0)),
        ),
        compiler_params=pltpu.CompilerParams(
            # time tiles are fully independent -> both axes parallel (v7x 2 TCs)
            dimension_semantics=("parallel", "parallel"),
            vmem_limit_bytes=32 * 1024 * 1024),
    )(seed_arr, x2d)

    if t_p == seq_length and padded == m:
        # Common case: no padding at all -> metadata-only reshape, no extra copy.
        return out.reshape((seq_length,) + orig_shape)
    out = out[:seq_length].reshape(seq_length, padded)[:, :m]
    return out.reshape((seq_length,) + orig_shape)


class SignedPoissonEncoder:
    """JAX/Pallas equivalent of norse's SignedPoissonEncoder."""

    def __init__(self, seq_length: int, f_max: float = 100, dt: float = 0.001):
        self.seq_length = int(seq_length)
        self.f_max = float(f_max)
        self.dt = float(dt)

    def __call__(self, x, seed: int = 0):
        return signed_poisson_encode(x, self.seq_length, seed=seed,
                                     f_max=self.f_max, dt=self.dt)


if __name__ == "__main__":
    key = jax.random.PRNGKey(0)
    # Inputs assumed in [-1, 1] (signed), NCHW-like shape.
    x = jax.random.uniform(key, (2, 4, 16, 16), jnp.float32, minval=-1.0, maxval=1.0)

    seq_length = 8
    enc = SignedPoissonEncoder(seq_length)
    out = jax.block_until_ready(enc(x, seed=1234))

    # Sanity checks on semantics.
    assert out.shape == (seq_length,) + x.shape
    assert out.dtype == jnp.float32
    # spikes are integer counts times sign(x); sign must match where nonzero
    assert bool(jnp.all(out == jnp.round(out)))
    sign_ok = jnp.where(out != 0, jnp.sign(out) == jnp.sign(x)[None], True)
    assert bool(jnp.all(sign_ok))
    # mean spike count per step should be roughly dt*f_max*E[|x|] (~0.05)
    mean_rate = float(jnp.mean(jnp.abs(out)))
    assert 0.0 < mean_rate < 0.2

    # Re-seeding is a runtime scalar now: must produce a (different) valid train
    # without retracing/recompiling.
    out2 = jax.block_until_ready(enc(x, seed=4321))
    assert out2.shape == out.shape

    print("KERNEL_OK")
</pallas_src>

<mosaic_0001>
module attributes {stable_mosaic.version = 11 : i64} {
  func.func @_signed_poisson_kernel(%arg0: i32, %arg1: i32, %arg2: memref<1xi32, #tpu.memory_space<smem>>, %arg3: memref<8x256xf32, #tpu.memory_space<vmem>>, %arg4: memref<8x8x256xf32, #tpu.memory_space<vmem>>) attributes {dimension_semantics = [#tpu.dimension_semantics<parallel>, #tpu.dimension_semantics<parallel>], iteration_bounds = array<i64: 1, 1>, scalar_prefetch = 1 : i64, scratch_operands = 0 : i64, tpu.core_type = #tpu.core_type<tc>, window_params = [{transform_indices = @transform_0, window_bounds = array<i64: 8, 256>}, {transform_indices = @transform_1, window_bounds = array<i64: 8, 8, 256>}]} {
    %c0 = arith.constant 0 : index
    %c0_0 = arith.constant 0 : index
    %0 = vector.load %arg3[%c0, %c0_0] : memref<8x256xf32, #tpu.memory_space<vmem>>, vector<8x256xf32>
    %1 = math.absf %0 : vector<8x256xf32>
    %cst = arith.constant 1.000000e-01 : f32
    %2 = vector.broadcast %cst : f32 to vector<8x256xf32>
    %3 = arith.mulf %2, %1 : vector<8x256xf32>
    %4 = tpu.bitcast %0 : vector<8x256xf32> -> vector<8x256xi32>
    %c-2147483648_i32 = arith.constant -2147483648 : i32
    %5 = vector.broadcast %c-2147483648_i32 : i32 to vector<8x256xi32>
    %6 = arith.andi %4, %5 : vector<8x256xi32>
    %cst_1 = arith.constant 0.000000e+00 : f32
    %7 = vector.broadcast %cst_1 : f32 to vector<8x256xf32>
    %8 = arith.subf %7, %3 : vector<8x256xf32>
    %9 = math.exp %8 : vector<8x256xf32>
    %cst_2 = arith.constant 0x4B800000 : f32
    %10 = vector.broadcast %cst_2 : f32 to vector<8x256xf32>
    %11 = arith.mulf %9, %10 : vector<8x256xf32>
    %12 = arith.fptosi %11 : vector<8x256xf32> to vector<8x256xi32>
    %cst_3 = arith.constant 1.000000e+00 : f32
    %13 = vector.broadcast %cst_3 : f32 to vector<8x256xf32>
    %14 = arith.mulf %3, %13 : vector<8x256xf32>
    %15 = arith.mulf %9, %14 : vector<8x256xf32>
    %16 = arith.addf %9, %15 : vector<8x256xf32>
    %cst_4 = arith.constant 0x4B800000 : f32
    %17 = vector.broadcast %cst_4 : f32 to vector<8x256xf32>
    %18 = arith.mulf %16, %17 : vector<8x256xf32>
    %19 = arith.fptosi %18 : vector<8x256xf32> to vector<8x256xi32>
    %cst_5 = arith.constant 5.000000e-01 : f32
    %20 = vector.broadcast %cst_5 : f32 to vector<8x256xf32>
    %21 = arith.mulf %3, %20 : vector<8x256xf32>
    %22 = arith.mulf %15, %21 : vector<8x256xf32>
    %23 = arith.addf %16, %22 : vector<8x256xf32>
    %cst_6 = arith.constant 0x4B800000 : f32
    %24 = vector.broadcast %cst_6 : f32 to vector<8x256xf32>
    %25 = arith.mulf %23, %24 : vector<8x256xf32>
    %26 = arith.fptosi %25 : vector<8x256xf32> to vector<8x256xi32>
    %cst_7 = arith.constant 0.333333343 : f32
    %27 = vector.broadcast %cst_7 : f32 to vector<8x256xf32>
    %28 = arith.mulf %3, %27 : vector<8x256xf32>
    %29 = arith.mulf %22, %28 : vector<8x256xf32>
    %30 = arith.addf %23, %29 : vector<8x256xf32>
    %cst_8 = arith.constant 0x4B800000 : f32
    %31 = vector.broadcast %cst_8 : f32 to vector<8x256xf32>
    %32 = arith.mulf %30, %31 : vector<8x256xf32>
    %33 = arith.fptosi %32 : vector<8x256xf32> to vector<8x256xi32>
    %cst_9 = arith.constant 2.500000e-01 : f32
    %34 = vector.broadcast %cst_9 : f32 to vector<8x256xf32>
    %35 = arith.mulf %3, %34 : vector<8x256xf32>
    %36 = arith.mulf %29, %35 : vector<8x256xf32>
    %37 = arith.addf %30, %36 : vector<8x256xf32>
    %cst_10 = arith.constant 0x4B800000 : f32
    %38 = vector.broadcast %cst_10 : f32 to vector<8x256xf32>
    %39 = arith.mulf %37, %38 : vector<8x256xf32>
    %40 = arith.fptosi %39 : vector<8x256xf32> to vector<8x256xi32>
    %41 = tpu.iota {dimensions = array<i32: 0>} : vector<8x256xi32>
    %42 = tpu.iota {dimensions = array<i32: 1>} : vector<8x256xi32>
    %c8_i32 = arith.constant 8 : i32
    %43 = arith.muli %arg0, %c8_i32 : i32
    %44 = vector.broadcast %43 : i32 to vector<8x256xi32>
    %45 = arith.addi %44, %41 : vector<8x256xi32>
    %c256_i32 = arith.constant 256 : i32
    %46 = vector.broadcast %c256_i32 : i32 to vector<8x256xi32>
    %47 = arith.muli %45, %46 : vector<8x256xi32>
    %48 = arith.addi %47, %42 : vector<8x256xi32>
    %49 = tpu.bitcast %48 : vector<8x256xi32> -> vector<8x256xi32>
    %c668265263_i32 = arith.constant 668265263 : i32
    %50 = vector.broadcast %c668265263_i32 : i32 to vector<8x256xi32>
    %51 = arith.muli %49, %50 : vector<8x256xi32>
    %c0_11 = arith.constant 0 : index
    %52 = memref.load %arg2[%c0_11] : memref<1xi32, #tpu.memory_space<smem>>
    %c8_i32_12 = arith.constant 8 : i32
    %53 = arith.muli %arg1, %c8_i32_12 : i32
    %c0_i32 = arith.constant 0 : i32
    %54 = arith.addi %53, %c0_i32 : i32
    %c-1640531527_i32 = arith.constant -1640531527 : i32
    %55 = arith.muli %54, %c-1640531527_i32 : i32
    %56 = arith.addi %52, %55 : i32
    %57 = vector.broadcast %56 : i32 to vector<8x256xi32>
    %58 = arith.addi %51, %57 : vector<8x256xi32>
    %c16_i32 = arith.constant 16 : i32
    %59 = vector.broadcast %c16_i32 : i32 to vector<8x256xi32>
    %60 = arith.shrui %58, %59 : vector<8x256xi32>
    %61 = arith.xori %58, %60 : vector<8x256xi32>
    %c-2048144789_i32 = arith.constant -2048144789 : i32
    %62 = vector.broadcast %c-2048144789_i32 : i32 to vector<8x256xi32>
    %63 = arith.muli %61, %62 : vector<8x256xi32>
    %c13_i32 = arith.constant 13 : i32
    %64 = vector.broadcast %c13_i32 : i32 to vector<8x256xi32>
    %65 = arith.shrui %63, %64 : vector<8x256xi32>
    %66 = arith.xori %63, %65 : vector<8x256xi32>
    %c-1028477387_i32 = arith.constant -1028477387 : i32
    %67 = vector.broadcast %c-1028477387_i32 : i32 to vector<8x256xi32>
    %68 = arith.muli %66, %67 : vector<8x256xi32>
    %c16_i32_13 = arith.constant 16 : i32
    %69 = vector.broadcast %c16_i32_13 : i32 to vector<8x256xi32>
    %70 = arith.shrui %68, %69 : vector<8x256xi32>
    %71 = arith.xori %68, %70 : vector<8x256xi32>
    %c8_i32_14 = arith.constant 8 : i32
    %72 = vector.broadcast %c8_i32_14 : i32 to vector<8x256xi32>
    %73 = arith.shrui %71, %72 : vector<8x256xi32>
    %74 = tpu.bitcast %73 : vector<8x256xi32> -> vector<8x256xi32>
    %75 = arith.cmpi sgt, %74, %12 : vector<8x256xi32>
    %76 = arith.extui %75 : vector<8x256xi1> to vector<8x256xi32>
    %77 = arith.cmpi sgt, %74, %19 : vector<8x256xi32>
    %78 = arith.extui %77 : vector<8x256xi1> to vector<8x256xi32>
    %79 = arith.addi %76, %78 : vector<8x256xi32>
    %80 = arith.cmpi sgt, %74, %26 : vector<8x256xi32>
    %81 = arith.extui %80 : vector<8x256xi1> to vector<8x256xi32>
    %82 = arith.addi %79, %81 : vector<8x256xi32>
    %83 = arith.cmpi sgt, %74, %33 : vector<8x256xi32>
    %84 = arith.extui %83 : vector<8x256xi1> to vector<8x256xi32>
    %85 = arith.addi %82, %84 : vector<8x256xi32>
    %86 = arith.cmpi sgt, %74, %40 : vector<8x256xi32>
    %87 = arith.extui %86 : vector<8x256xi1> to vector<8x256xi32>
    %88 = arith.addi %85, %87 : vector<8x256xi32>
    %89 = arith.sitofp %88 : vector<8x256xi32> to vector<8x256xf32>
    %90 = tpu.bitcast %89 : vector<8x256xf32> -> vector<8x256xi32>
    %91 = arith.ori %90, %6 : vector<8x256xi32>
    %92 = tpu.bitcast %91 : vector<8x256xi32> -> vector<8x256xf32>
    %c0_15 = arith.constant 0 : index
    %c0_16 = arith.constant 0 : index
    %c0_17 = arith.constant 0 : index
    %93 = vector.load %arg4[%c0_15, %c0_16, %c0_17] : memref<8x8x256xf32, #tpu.memory_space<vmem>>, vector<1x8x256xf32>
    %94 = vector.shape_cast %93 : vector<1x8x256xf32> to vector<8x256xf32>
    %95 = vector.shape_cast %92 : vector<8x256xf32> to vector<1x8x256xf32>
    tpu.vector_store %arg4[%c0_15, %c0_16, %c0_17], %95 {strides = array<i32>} : memref<8x8x256xf32, #tpu.memory_space<vmem>>, vector<1x8x256xf32>,
    %c1_i32 = arith.constant 1 : i32
    %96 = arith.addi %53, %c1_i32 : i32
    %c-1640531527_i32_18 = arith.constant -1640531527 : i32
    %97 = arith.muli %96, %c-1640531527_i32_18 : i32
    %98 = arith.addi %52, %97 : i32
    %99 = vector.broadcast %98 : i32 to vector<8x256xi32>
    %100 = arith.addi %51, %99 : vector<8x256xi32>
    %c16_i32_19 = arith.constant 16 : i32
    %101 = vector.broadcast %c16_i32_19 : i32 to vector<8x256xi32>
    %102 = arith.shrui %100, %101 : vector<8x256xi32>
    %103 = arith.xori %100, %102 : vector<8x256xi32>
    %c-2048144789_i32_20 = arith.constant -2048144789 : i32
    %104 = vector.broadcast %c-2048144789_i32_20 : i32 to vector<8x256xi32>
    %105 = arith.muli %103, %104 : vector<8x256xi32>
    %c13_i32_21 = arith.constant 13 : i32
    %106 = vector.broadcast %c13_i32_21 : i32 to vector<8x256xi32>
    %107 = arith.shrui %105, %106 : vector<8x256xi32>
    %108 = arith.xori %105, %107 : vector<8x256xi32>
    %c-1028477387_i32_22 = arith.constant -1028477387 : i32
    %109 = vector.broadcast %c-1028477387_i32_22 : i32 to vector<8x256xi32>
    %110 = arith.muli %108, %109 : vector<8x256xi32>
    %c16_i32_23 = arith.constant 16 : i32
    %111 = vector.broadcast %c16_i32_23 : i32 to vector<8x256xi32>
    %112 = arith.shrui %110, %111 : vector<8x256xi32>
    %113 = arith.xori %110, %112 : vector<8x256xi32>
    %c8_i32_24 = arith.constant 8 : i32
    %114 = vector.broadcast %c8_i32_24 : i32 to vector<8x256xi32>
    %115 = arith.shrui %113, %114 : vector<8x256xi32>
    %116 = tpu.bitcast %115 : vector<8x256xi32> -> vector<8x256xi32>
    %117 = arith.cmpi sgt, %116, %12 : vector<8x256xi32>
    %118 = arith.extui %117 : vector<8x256xi1> to vector<8x256xi32>
    %119 = arith.cmpi sgt, %116, %19 : vector<8x256xi32>
    %120 = arith.extui %119 : vector<8x256xi1> to vector<8x256xi32>
    %121 = arith.addi %118, %120 : vector<8x256xi32>
    %122 = arith.cmpi sgt, %116, %26 : vector<8x256xi32>
    %123 = arith.extui %122 : vector<8x256xi1> to vector<8x256xi32>
    %124 = arith.addi %121, %123 : vector<8x256xi32>
    %125 = arith.cmpi sgt, %116, %33 : vector<8x256xi32>
    %126 = arith.extui %125 : vector<8x256xi1> to vector<8x256xi32>
    %127 = arith.addi %124, %126 : vector<8x256xi32>
    %128 = arith.cmpi sgt, %116, %40 : vector<8x256xi32>
    %129 = arith.extui %128 : vector<8x256xi1> to vector<8x256xi32>
    %130 = arith.addi %127, %129 : vector<8x256xi32>
    %131 = arith.sitofp %130 : vector<8x256xi32> to vector<8x256xf32>
    %132 = tpu.bitcast %131 : vector<8x256xf32> -> vector<8x256xi32>
    %133 = arith.ori %132, %6 : vector<8x256xi32>
    %134 = tpu.bitcast %133 : vector<8x256xi32> -> vector<8x256xf32>
    %c1 = arith.constant 1 : index
    %c0_25 = arith.constant 0 : index
    %c0_26 = arith.constant 0 : index
    %135 = vector.load %arg4[%c1, %c0_25, %c0_26] : memref<8x8x256xf32, #tpu.memory_space<vmem>>, vector<1x8x256xf32>
    %136 = vector.shape_cast %135 : vector<1x8x256xf32> to vector<8x256xf32>
    %137 = vector.shape_cast %134 : vector<8x256xf32> to vector<1x8x256xf32>
    tpu.vector_store %arg4[%c1, %c0_25, %c0_26], %137 {strides = array<i32>} : memref<8x8x256xf32, #tpu.memory_space<vmem>>, vector<1x8x256xf32>,
    %c2_i32 = arith.constant 2 : i32
    %138 = arith.addi %53, %c2_i32 : i32
    %c-1640531527_i32_27 = arith.constant -1640531527 : i32
    %139 = arith.muli %138, %c-1640531527_i32_27 : i32
    %140 = arith.addi %52, %139 : i32
    %141 = vector.broadcast %140 : i32 to vector<8x256xi32>
    %142 = arith.addi %51, %141 : vector<8x256xi32>
    %c16_i32_28 = arith.constant 16 : i32
    %143 = vector.broadcast %c16_i32_28 : i32 to vector<8x256xi32>
    %144 = arith.shrui %142, %143 : vector<8x256xi32>
    %145 = arith.xori %142, %144 : vector<8x256xi32>
    %c-2048144789_i32_29 = arith.constant -2048144789 : i32
    %146 = vector.broadcast %c-2048144789_i32_29 : i32 to vector<8x256xi32>
    %147 = arith.muli %145, %146 : vector<8x256xi32>
    %c13_i32_30 = arith.constant 13 : i32
    %148 = vector.broadcast %c13_i32_30 : i32 to vector<8x256xi32>
    %149 = arith.shrui %147, %148 : vector<8x256xi32>
    %150 = arith.xori %147, %149 : vector<8x256xi32>
    %c-1028477387_i32_31 = arith.constant -1028477387 : i32
    %151 = vector.broadcast %c-1028477387_i32_31 : i32 to vector<8x256xi32>
    %152 = arith.muli %150, %151 : vector<8x256xi32>
    %c16_i32_32 = arith.constant 16 : i32
    %153 = vector.broadcast %c16_i32_32 : i32 to vector<8x256xi32>
    %154 = arith.shrui %152, %153 : vector<8x256xi32>
    %155 = arith.xori %152, %154 : vector<8x256xi32>
    %c8_i32_33 = arith.constant 8 : i32
    %156 = vector.broadcast %c8_i32_33 : i32 to vector<8x256xi32>
    %157 = arith.shrui %155, %156 : vector<8x256xi32>
    %158 = tpu.bitcast %157 : vector<8x256xi32> -> vector<8x256xi32>
    %159 = arith.cmpi sgt, %158, %12 : vector<8x256xi32>
    %160 = arith.extui %159 : vector<8x256xi1> to vector<8x256xi32>
    %161 = arith.cmpi sgt, %158, %19 : vector<8x256xi32>
    %162 = arith.extui %161 : vector<8x256xi1> to vector<8x256xi32>
    %163 = arith.addi %160, %162 : vector<8x256xi32>
    %164 = arith.cmpi sgt, %158, %26 : vector<8x256xi32>
    %165 = arith.extui %164 : vector<8x256xi1> to vector<8x256xi32>
    %166 = arith.addi %163, %165 : vector<8x256xi32>
    %167 = arith.cmpi sgt, %158, %33 : vector<8x256xi32>
    %168 = arith.extui %167 : vector<8x256xi1> to vector<8x256xi32>
    %169 = arith.addi %166, %168 : vector<8x256xi32>
    %170 = arith.cmpi sgt, %158, %40 : vector<8x256xi32>
    %171 = arith.extui %170 : vector<8x256xi1> to vector<8x256xi32>
    %172 = arith.addi %169, %171 : vector<8x256xi32>
    %173 = arith.sitofp %172 : vector<8x256xi32> to vector<8x256xf32>
    %174 = tpu.bitcast %173 : vector<8x256xf32> -> vector<8x256xi32>
    %175 = arith.ori %174, %6 : vector<8x256xi32>
    %176 = tpu.bitcast %175 : vector<8x256xi32> -> vector<8x256xf32>
    %c2 = arith.constant 2 : index
    %c0_34 = arith.constant 0 : index
    %c0_35 = arith.constant 0 : index
    %177 = vector.load %arg4[%c2, %c0_34, %c0_35] : memref<8x8x256xf32, #tpu.memory_space<vmem>>, vector<1x8x256xf32>
    %178 = vector.shape_cast %177 : vector<1x8x256xf32> to vector<8x256xf32>
    %179 = vector.shape_cast %176 : vector<8x256xf32> to vector<1x8x256xf32>
    tpu.vector_store %arg4[%c2, %c0_34, %c0_35], %179 {strides = array<i32>} : memref<8x8x256xf32, #tpu.memory_space<vmem>>, vector<1x8x256xf32>,
    %c3_i32 = arith.constant 3 : i32
    %180 = arith.addi %53, %c3_i32 : i32
    %c-1640531527_i32_36 = arith.constant -1640531527 : i32
    %181 = arith.muli %180, %c-1640531527_i32_36 : i32
    %182 = arith.addi %52, %181 : i32
    %183 = vector.broadcast %182 : i32 to vector<8x256xi32>
    %184 = arith.addi %51, %183 : vector<8x256xi32>
    %c16_i32_37 = arith.constant 16 : i32
    %185 = vector.broadcast %c16_i32_37 : i32 to vector<8x256xi32>
    %186 = arith.shrui %184, %185 : vector<8x256xi32>
    %187 = arith.xori %184, %186 : vector<8x256xi32>
    %c-2048144789_i32_38 = arith.constant -2048144789 : i32
    %188 = vector.broadcast %c-2048144789_i32_38 : i32 to vector<8x256xi32>
    %189 = arith.muli %187, %188 : vector<8x256xi32>
    %c13_i32_39 = arith.constant 13 : i32
    %190 = vector.broadcast %c13_i32_39 : i32 to vector<8x256xi32>
    %191 = arith.shrui %189, %190 : vector<8x256xi32>
    %192 = arith.xori %189, %191 : vector<8x256xi32>
    %c-1028477387_i32_40 = arith.constant -1028477387 : i32
    %193 = vector.broadcast %c-1028477387_i32_40 : i32 to vector<8x256xi32>
    %194 = arith.muli %192, %193 : vector<8x256xi32>
    %c16_i32_41 = arith.constant 16 : i32
    %195 = vector.broadcast %c16_i32_41 : i32 to vector<8x256xi32>
    %196 = arith.shrui %194, %195 : vector<8x256xi32>
    %197 = arith.xori %194, %196 : vector<8x256xi32>
    %c8_i32_42 = arith.constant 8 : i32
    %198 = vector.broadcast %c8_i32_42 : i32 to vector<8x256xi32>
    %199 = arith.shrui %197, %198 : vector<8x256xi32>
    %200 = tpu.bitcast %199 : vector<8x256xi32> -> vector<8x256xi32>
    %201 = arith.cmpi sgt, %200, %12 : vector<8x256xi32>
    %202 = arith.extui %201 : vector<8x256xi1> to vector<8x256xi32>
    %203 = arith.cmpi sgt, %200, %19 : vector<8x256xi32>
    %204 = arith.extui %203 : vector<8x256xi1> to vector<8x256xi32>
    %205 = arith.addi %202, %204 : vector<8x256xi32>
    %206 = arith.cmpi sgt, %200, %26 : vector<8x256xi32>
    %207 = arith.extui %206 : vector<8x256xi1> to vector<8x256xi32>
    %208 = arith.addi %205, %207 : vector<8x256xi32>
    %209 = arith.cmpi sgt, %200, %33 : vector<8x256xi32>
    %210 = arith.extui %209 : vector<8x256xi1> to vector<8x256xi32>
    %211 = arith.addi %208, %210 : vector<8x256xi32>
    %212 = arith.cmpi sgt, %200, %40 : vector<8x256xi32>
    %213 = arith.extui %212 : vector<8x256xi1> to vector<8x256xi32>
    %214 = arith.addi %211, %213 : vector<8x256xi32>
    %215 = arith.sitofp %214 : vector<8x256xi32> to vector<8x256xf32>
    %216 = tpu.bitcast %215 : vector<8x256xf32> -> vector<8x256xi32>
    %217 = arith.ori %216, %6 : vector<8x256xi32>
    %218 = tpu.bitcast %217 : vector<8x256xi32> -> vector<8x256xf32>
    %c3 = arith.constant 3 : index
    %c0_43 = arith.constant 0 : index
    %c0_44 = arith.constant 0 : index
    %219 = vector.load %arg4[%c3, %c0_43, %c0_44] : memref<8x8x256xf32, #tpu.memory_space<vmem>>, vector<1x8x256xf32>
    %220 = vector.shape_cast %219 : vector<1x8x256xf32> to vector<8x256xf32>
    %221 = vector.shape_cast %218 : vector<8x256xf32> to vector<1x8x256xf32>
    tpu.vector_store %arg4[%c3, %c0_43, %c0_44], %221 {strides = array<i32>} : memref<8x8x256xf32, #tpu.memory_space<vmem>>, vector<1x8x256xf32>,
    %c4_i32 = arith.constant 4 : i32
    %222 = arith.addi %53, %c4_i32 : i32
    %c-1640531527_i32_45 = arith.constant -1640531527 : i32
    %223 = arith.muli %222, %c-1640531527_i32_45 : i32
    %224 = arith.addi %52, %223 : i32
    %225 = vector.broadcast %224 : i32 to vector<8x256xi32>
    %226 = arith.addi %51, %225 : vector<8x256xi32>
    %c16_i32_46 = arith.constant 16 : i32
    %227 = vector.broadcast %c16_i32_46 : i32 to vector<8x256xi32>
    %228 = arith.shrui %226, %227 : vector<8x256xi32>
    %229 = arith.xori %226, %228 : vector<8x256xi32>
    %c-2048144789_i32_47 = arith.constant -2048144789 : i32
    %230 = vector.broadcast %c-2048144789_i32_47 : i32 to vector<8x256xi32>
    %231 = arith.muli %229, %230 : vector<8x256xi32>
    %c13_i32_48 = arith.constant 13 : i32
    %232 = vector.broadcast %c13_i32_48 : i32 to vector<8x256xi32>
    %233 = arith.shrui %231, %232 : vector<8x256xi32>
    %234 = arith.xori %231, %233 : vector<8x256xi32>
    %c-1028477387_i32_49 = arith.constant -1028477387 : i32
    %235 = vector.broadcast %c-1028477387_i32_49 : i32 to vector<8x256xi32>
    %236 = arith.muli %234, %235 : vector<8x256xi32>
    %c16_i32_50 = arith.constant 16 : i32
    %237 = vector.broadcast %c16_i32_50 : i32 to vector<8x256xi32>
    %238 = arith.shrui %236, %237 : vector<8x256xi32>
    %239 = arith.xori %236, %238 : vector<8x256xi32>
    %c8_i32_51 = arith.constant 8 : i32
    %240 = vector.broadcast %c8_i32_51 : i32 to vector<8x256xi32>
    %241 = arith.shrui %239, %240 : vector<8x256xi32>
    %242 = tpu.bitcast %241 : vector<8x256xi32> -> vector<8x256xi32>
    %243 = arith.cmpi sgt, %242, %12 : vector<8x256xi32>
    %244 = arith.extui %243 : vector<8x256xi1> to vector<8x256xi32>
    %245 = arith.cmpi sgt, %242, %19 : vector<8x256xi32>
    %246 = arith.extui %245 : vector<8x256xi1> to vector<8x256xi32>
    %247 = arith.addi %244, %246 : vector<8x256xi32>
    %248 = arith.cmpi sgt, %242, %26 : vector<8x256xi32>
    %249 = arith.extui %248 : vector<8x256xi1> to vector<8x256xi32>
    %250 = arith.addi %247, %249 : vector<8x256xi32>
    %251 = arith.cmpi sgt, %242, %33 : vector<8x256xi32>
    %252 = arith.extui %251 : vector<8x256xi1> to vector<8x256xi32>
    %253 = arith.addi %250, %252 : vector<8x256xi32>
    %254 = arith.cmpi sgt, %242, %40 : vector<8x256xi32>
    %255 = arith.extui %254 : vector<8x256xi1> to vector<8x256xi32>
    %256 = arith.addi %253, %255 : vector<8x256xi32>
    %257 = arith.sitofp %256 : vector<8x256xi32> to vector<8x256xf32>
    %258 = tpu.bitcast %257 : vector<8x256xf32> -> vector<8x256xi32>
    %259 = arith.ori %258, %6 : vector<8x256xi32>
    %260 = tpu.bitcast %259 : vector<8x256xi32> -> vector<8x256xf32>
    %c4 = arith.constant 4 : index
    %c0_52 = arith.constant 0 : index
    %c0_53 = arith.constant 0 : index
    %261 = vector.load %arg4[%c4, %c0_52, %c0_53] : memref<8x8x256xf32, #tpu.memory_space<vmem>>, vector<1x8x256xf32>
    %262 = vector.shape_cast %261 : vector<1x8x256xf32> to vector<8x256xf32>
    %263 = vector.shape_cast %260 : vector<8x256xf32> to vector<1x8x256xf32>
    tpu.vector_store %arg4[%c4, %c0_52, %c0_53], %263 {strides = array<i32>} : memref<8x8x256xf32, #tpu.memory_space<vmem>>, vector<1x8x256xf32>,
    %c5_i32 = arith.constant 5 : i32
    %264 = arith.addi %53, %c5_i32 : i32
    %c-1640531527_i32_54 = arith.constant -1640531527 : i32
    %265 = arith.muli %264, %c-1640531527_i32_54 : i32
    %266 = arith.addi %52, %265 : i32
    %267 = vector.broadcast %266 : i32 to vector<8x256xi32>
    %268 = arith.addi %51, %267 : vector<8x256xi32>
    %c16_i32_55 = arith.constant 16 : i32
    %269 = vector.broadcast %c16_i32_55 : i32 to vector<8x256xi32>
    %270 = arith.shrui %268, %269 : vector<8x256xi32>
    %271 = arith.xori %268, %270 : vector<8x256xi32>
    %c-2048144789_i32_56 = arith.constant -2048144789 : i32
    %272 = vector.broadcast %c-2048144789_i32_56 : i32 to vector<8x256xi32>
    %273 = arith.muli %271, %272 : vector<8x256xi32>
    %c13_i32_57 = arith.constant 13 : i32
    %274 = vector.broadcast %c13_i32_57 : i32 to vector<8x256xi32>
    %275 = arith.shrui %273, %274 : vector<8x256xi32>
    %276 = arith.xori %273, %275 : vector<8x256xi32>
    %c-1028477387_i32_58 = arith.constant -1028477387 : i32
    %277 = vector.broadcast %c-1028477387_i32_58 : i32 to vector<8x256xi32>
    %278 = arith.muli %276, %277 : vector<8x256xi32>
    %c16_i32_59 = arith.constant 16 : i32
    %279 = vector.broadcast %c16_i32_59 : i32 to vector<8x256xi32>
    %280 = arith.shrui %278, %279 : vector<8x256xi32>
    %281 = arith.xori %278, %280 : vector<8x256xi32>
    %c8_i32_60 = arith.constant 8 : i32
    %282 = vector.broadcast %c8_i32_60 : i32 to vector<8x256xi32>
    %283 = arith.shrui %281, %282 : vector<8x256xi32>
    %284 = tpu.bitcast %283 : vector<8x256xi32> -> vector<8x256xi32>
    %285 = arith.cmpi sgt, %284, %12 : vector<8x256xi32>
    %286 = arith.extui %285 : vector<8x256xi1> to vector<8x256xi32>
    %287 = arith.cmpi sgt, %284, %19 : vector<8x256xi32>
    %288 = arith.extui %287 : vector<8x256xi1> to vector<8x256xi32>
    %289 = arith.addi %286, %288 : vector<8x256xi32>
    %290 = arith.cmpi sgt, %284, %26 : vector<8x256xi32>
    %291 = arith.extui %290 : vector<8x256xi1> to vector<8x256xi32>
    %292 = arith.addi %289, %291 : vector<8x256xi32>
    %293 = arith.cmpi sgt, %284, %33 : vector<8x256xi32>
    %294 = arith.extui %293 : vector<8x256xi1> to vector<8x256xi32>
    %295 = arith.addi %292, %294 : vector<8x256xi32>
    %296 = arith.cmpi sgt, %284, %40 : vector<8x256xi32>
    %297 = arith.extui %296 : vector<8x256xi1> to vector<8x256xi32>
    %298 = arith.addi %295, %297 : vector<8x256xi32>
    %299 = arith.sitofp %298 : vector<8x256xi32> to vector<8x256xf32>
    %300 = tpu.bitcast %299 : vector<8x256xf32> -> vector<8x256xi32>
    %301 = arith.ori %300, %6 : vector<8x256xi32>
    %302 = tpu.bitcast %301 : vector<8x256xi32> -> vector<8x256xf32>
    %c5 = arith.constant 5 : index
    %c0_61 = arith.constant 0 : index
    %c0_62 = arith.constant 0 : index
    %303 = vector.load %arg4[%c5, %c0_61, %c0_62] : memref<8x8x256xf32, #tpu.memory_space<vmem>>, vector<1x8x256xf32>
    %304 = vector.shape_cast %303 : vector<1x8x256xf32> to vector<8x256xf32>
    %305 = vector.shape_cast %302 : vector<8x256xf32> to vector<1x8x256xf32>
    tpu.vector_store %arg4[%c5, %c0_61, %c0_62], %305 {strides = array<i32>} : memref<8x8x256xf32, #tpu.memory_space<vmem>>, vector<1x8x256xf32>,
    %c6_i32 = arith.constant 6 : i32
    %306 = arith.addi %53, %c6_i32 : i32
    %c-1640531527_i32_63 = arith.constant -1640531527 : i32
    %307 = arith.muli %306, %c-1640531527_i32_63 : i32
    %308 = arith.addi %52, %307 : i32
    %309 = vector.broadcast %308 : i32 to vector<8x256xi32>
    %310 = arith.addi %51, %309 : vector<8x256xi32>
    %c16_i32_64 = arith.constant 16 : i32
    %311 = vector.broadcast %c16_i32_64 : i32 to vector<8x256xi32>
    %312 = arith.shrui %310, %311 : vector<8x256xi32>
    %313 = arith.xori %310, %312 : vector<8x256xi32>
    %c-2048144789_i32_65 = arith.constant -2048144789 : i32
    %314 = vector.broadcast %c-2048144789_i32_65 : i32 to vector<8x256xi32>
    %315 = arith.muli %313, %314 : vector<8x256xi32>
    %c13_i32_66 = arith.constant 13 : i32
    %316 = vector.broadcast %c13_i32_66 : i32 to vector<8x256xi32>
    %317 = arith.shrui %315, %316 : vector<8x256xi32>
    %318 = arith.xori %315, %317 : vector<8x256xi32>
    %c-1028477387_i32_67 = arith.constant -1028477387 : i32
    %319 = vector.broadcast %c-1028477387_i32_67 : i32 to vector<8x256xi32>
    %320 = arith.muli %318, %319 : vector<8x256xi32>
    %c16_i32_68 = arith.constant 16 : i32
    %321 = vector.broadcast %c16_i32_68 : i32 to vector<8x256xi32>
    %322 = arith.shrui %320, %321 : vector<8x256xi32>
    %323 = arith.xori %320, %322 : vector<8x256xi32>
    %c8_i32_69 = arith.constant 8 : i32
    %324 = vector.broadcast %c8_i32_69 : i32 to vector<8x256xi32>
    %325 = arith.shrui %323, %324 : vector<8x256xi32>
    %326 = tpu.bitcast %325 : vector<8x256xi32> -> vector<8x256xi32>
    %327 = arith.cmpi sgt, %326, %12 : vector<8x256xi32>
    %328 = arith.extui %327 : vector<8x256xi1> to vector<8x256xi32>
    %329 = arith.cmpi sgt, %326, %19 : vector<8x256xi32>
    %330 = arith.extui %329 : vector<8x256xi1> to vector<8x256xi32>
    %331 = arith.addi %328, %330 : vector<8x256xi32>
    %332 = arith.cmpi sgt, %326, %26 : vector<8x256xi32>
    %333 = arith.extui %332 : vector<8x256xi1> to vector<8x256xi32>
    %334 = arith.addi %331, %333 : vector<8x256xi32>
    %335 = arith.cmpi sgt, %326, %33 : vector<8x256xi32>
    %336 = arith.extui %335 : vector<8x256xi1> to vector<8x256xi32>
    %337 = arith.addi %334, %336 : vector<8x256xi32>
    %338 = arith.cmpi sgt, %326, %40 : vector<8x256xi32>
    %339 = arith.extui %338 : vector<8x256xi1> to vector<8x256xi32>
    %340 = arith.addi %337, %339 : vector<8x256xi32>
    %341 = arith.sitofp %340 : vector<8x256xi32> to vector<8x256xf32>
    %342 = tpu.bitcast %341 : vector<8x256xf32> -> vector<8x256xi32>
    %343 = arith.ori %342, %6 : vector<8x256xi32>
    %344 = tpu.bitcast %343 : vector<8x256xi32> -> vector<8x256xf32>
    %c6 = arith.constant 6 : index
    %c0_70 = arith.constant 0 : index
    %c0_71 = arith.constant 0 : index
    %345 = vector.load %arg4[%c6, %c0_70, %c0_71] : memref<8x8x256xf32, #tpu.memory_space<vmem>>, vector<1x8x256xf32>
    %346 = vector.shape_cast %345 : vector<1x8x256xf32> to vector<8x256xf32>
    %347 = vector.shape_cast %344 : vector<8x256xf32> to vector<1x8x256xf32>
    tpu.vector_store %arg4[%c6, %c0_70, %c0_71], %347 {strides = array<i32>} : memref<8x8x256xf32, #tpu.memory_space<vmem>>, vector<1x8x256xf32>,
    %c7_i32 = arith.constant 7 : i32
    %348 = arith.addi %53, %c7_i32 : i32
    %c-1640531527_i32_72 = arith.constant -1640531527 : i32
    %349 = arith.muli %348, %c-1640531527_i32_72 : i32
    %350 = arith.addi %52, %349 : i32
    %351 = vector.broadcast %350 : i32 to vector<8x256xi32>
    %352 = arith.addi %51, %351 : vector<8x256xi32>
    %c16_i32_73 = arith.constant 16 : i32
    %353 = vector.broadcast %c16_i32_73 : i32 to vector<8x256xi32>
    %354 = arith.shrui %352, %353 : vector<8x256xi32>
    %355 = arith.xori %352, %354 : vector<8x256xi32>
    %c-2048144789_i32_74 = arith.constant -2048144789 : i32
    %356 = vector.broadcast %c-2048144789_i32_74 : i32 to vector<8x256xi32>
    %357 = arith.muli %355, %356 : vector<8x256xi32>
    %c13_i32_75 = arith.constant 13 : i32
    %358 = vector.broadcast %c13_i32_75 : i32 to vector<8x256xi32>
    %359 = arith.shrui %357, %358 : vector<8x256xi32>
    %360 = arith.xori %357, %359 : vector<8x256xi32>
    %c-1028477387_i32_76 = arith.constant -1028477387 : i32
    %361 = vector.broadcast %c-1028477387_i32_76 : i32 to vector<8x256xi32>
    %362 = arith.muli %360, %361 : vector<8x256xi32>
    %c16_i32_77 = arith.constant 16 : i32
    %363 = vector.broadcast %c16_i32_77 : i32 to vector<8x256xi32>
    %364 = arith.shrui %362, %363 : vector<8x256xi32>
    %365 = arith.xori %362, %364 : vector<8x256xi32>
    %c8_i32_78 = arith.constant 8 : i32
    %366 = vector.broadcast %c8_i32_78 : i32 to vector<8x256xi32>
    %367 = arith.shrui %365, %366 : vector<8x256xi32>
    %368 = tpu.bitcast %367 : vector<8x256xi32> -> vector<8x256xi32>
    %369 = arith.cmpi sgt, %368, %12 : vector<8x256xi32>
    %370 = arith.extui %369 : vector<8x256xi1> to vector<8x256xi32>
    %371 = arith.cmpi sgt, %368, %19 : vector<8x256xi32>
    %372 = arith.extui %371 : vector<8x256xi1> to vector<8x256xi32>
    %373 = arith.addi %370, %372 : vector<8x256xi32>
    %374 = arith.cmpi sgt, %368, %26 : vector<8x256xi32>
    %375 = arith.extui %374 : vector<8x256xi1> to vector<8x256xi32>
    %376 = arith.addi %373, %375 : vector<8x256xi32>
    %377 = arith.cmpi sgt, %368, %33 : vector<8x256xi32>
    %378 = arith.extui %377 : vector<8x256xi1> to vector<8x256xi32>
    %379 = arith.addi %376, %378 : vector<8x256xi32>
    %380 = arith.cmpi sgt, %368, %40 : vector<8x256xi32>
    %381 = arith.extui %380 : vector<8x256xi1> to vector<8x256xi32>
    %382 = arith.addi %379, %381 : vector<8x256xi32>
    %383 = arith.sitofp %382 : vector<8x256xi32> to vector<8x256xf32>
    %384 = tpu.bitcast %383 : vector<8x256xf32> -> vector<8x256xi32>
    %385 = arith.ori %384, %6 : vector<8x256xi32>
    %386 = tpu.bitcast %385 : vector<8x256xi32> -> vector<8x256xf32>
    %c7 = arith.constant 7 : index
    %c0_79 = arith.constant 0 : index
    %c0_80 = arith.constant 0 : index
    %387 = vector.load %arg4[%c7, %c0_79, %c0_80] : memref<8x8x256xf32, #tpu.memory_space<vmem>>, vector<1x8x256xf32>
    %388 = vector.shape_cast %387 : vector<1x8x256xf32> to vector<8x256xf32>
    %389 = vector.shape_cast %386 : vector<8x256xf32> to vector<1x8x256xf32>
    tpu.vector_store %arg4[%c7, %c0_79, %c0_80], %389 {strides = array<i32>} : memref<8x8x256xf32, #tpu.memory_space<vmem>>, vector<1x8x256xf32>,
    return
  }
  func.func @transform_0(%arg0: i32, %arg1: i32, %arg2: memref<1xi32, #tpu.memory_space<smem>>) -> (i32, i32) {
    %c0_i32 = arith.constant 0 : i32
    %c0_i32_0 = arith.constant 0 : i32
    return %arg0, %c0_i32 : i32, i32
  }
  func.func @transform_1(%arg0: i32, %arg1: i32, %arg2: memref<1xi32, #tpu.memory_space<smem>>) -> (i32, i32, i32) {
    %c0_i32 = arith.constant 0 : i32
    %c0_i32_0 = arith.constant 0 : i32
    return %arg1, %arg0, %c0_i32 : i32, i32, i32
  }
}

</mosaic_0001>

<llo_original>
// kernel: signed_poisson_encode.1
$region0: #{signed_poisson_encode.1}
  #allocation0 [shape = 'u32[]', space=smem, size = 0x4, offset = 0x4, fixed_abs, tag = 'smem constant byte address 0x4 - core index']
  #allocation1 [shape = 'u32[144,128]{1,0:T(1,128)}', space=vmem, size = 0x12000, scoped, tag = 'internal scratch']
  #allocation2 [shape = 's32[1]{0}', space=sflag, size = 0x4, scoped, tag = 'scoped memory for signed_poisson_encode.1']
  #allocation3 [shape = 's32[1]{0:T(128)S(6)}', space=smem, size = 0x200, scoped, tag = 'prefetched SMEM operand 0']
  %s0 = inlined_call_operand.<no memory space> [shape: s32[1], index: 0, kind: input, shape index: {}]
  %s1 = inlined_call_operand.vmem [shape: f32[8,256], index: 1, kind: input, shape index: {}]
  %s2 = inlined_call_operand.vmem [shape: f32[8,8,256], index: 2, kind: output, shape index: {}]
  %s3 = sld [smem:[#allocation0]]
  $region14: #{signed_poisson_encode.1} parent=0
    _
  %s5 = ssub.s32 1, %s3
  %s6 = scalar_select 0, %s5, %s3
  %7 = sst [smem:[#allocation3]] %s0
  // Predicated region
  $region2: #{signed_poisson_encode.1} parent=0 // pred_check
    _
  $region3: #{signed_poisson_encode.1} parent=0 // pred_check_branch
    %9 = sbr.rel (0) target = $region5
  $region4: #{signed_poisson_encode.1} parent=0 // pred_region
    _
  $region5: #{signed_poisson_encode.1} parent=0 // pred_fallthru
    _
  %v10 = vld [vmem:[%s1] sm:$0xff]
  %v11 = vld [vmem:[%s1 + $0x8] sm:$0xff]
  %v12 = vand.u32 2147483647, %v10
  %v13 = vand.u32 2147483647, %v11
  %v14 = vmul.f32 %v12, 0.1
  %v15 = vmul.f32 %v13, 0.1
  %v18 = vand.u32 %v10, 2147483648
  %v19 = vand.u32 %v11, 2147483648
  %v20 = vsub.f32 0.0, %v14
  %v21 = vsub.f32 0.0, %v15
  %v22 = vmul.f32 %v20, 1.442695
  %v23 = vpow.pop %v22
  %v24 = vmul.f32 %v21, 1.442695
  %v25 = vpow.pop %v24
  %v26 = vmul.f32 %v23, 16777216.0
  %v27 = vmul.f32 %v25, 16777216.0
  %v28 = vcvt.f32.s32.to.zero.pseudo %v26
  %v29 = vcvt.f32.s32.to.zero.pseudo %v27
  %v30 = vmul.f32 %v23, %v14
  %v31 = vmul.f32 %v25, %v15
  %v32 = vadd.f32 %v23, %v30
  %v33 = vadd.f32 %v25, %v31
  %v34 = vmul.f32 %v32, 16777216.0
  %v35 = vmul.f32 %v33, 16777216.0
  %v36 = vcvt.f32.s32.to.zero.pseudo %v34
  %v37 = vcvt.f32.s32.to.zero.pseudo %v35
  %v38 = vmul.f32 %v14, 0.5
  %v39 = vmul.f32 %v15, 0.5
  %v40 = vmul.f32 %v30, %v38
  %v41 = vmul.f32 %v31, %v39
  %v42 = vadd.f32 %v32, %v40
  %v43 = vadd.f32 %v33, %v41
  %v44 = vmul.f32 %v42, 16777216.0
  %v45 = vmul.f32 %v43, 16777216.0
  %v46 = vcvt.f32.s32.to.zero.pseudo %v44
  %v47 = vcvt.f32.s32.to.zero.pseudo %v45
  %v48 = vmul.f32 %v14, 0.33333334
  %v49 = vmul.f32 %v15, 0.33333334
  %v50 = vmul.f32 %v40, %v48
  %v51 = vmul.f32 %v41, %v49
  %v52 = vadd.f32 %v42, %v50
  %v53 = vadd.f32 %v43, %v51
  %v54 = vmul.f32 %v52, 16777216.0
  %v55 = vmul.f32 %v53, 16777216.0
  %v56 = vcvt.f32.s32.to.zero.pseudo %v54
  %v57 = vcvt.f32.s32.to.zero.pseudo %v55
  %v58 = vmul.f32 %v14, 0.25
  %v59 = vmul.f32 %v15, 0.25
  %v60 = vmul.f32 %v50, %v58
  %v61 = vmul.f32 %v51, %v59
  %v62 = vadd.f32 %v52, %v60
  %v63 = vadd.f32 %v53, %v61
  %v64 = vmul.f32 %v62, 16777216.0
  %v65 = vmul.f32 %v63, 16777216.0
  %v66 = vcvt.f32.s32.to.zero.pseudo %v64
  %v67 = vcvt.f32.s32.to.zero.pseudo %v65
  %v68 = vlaneseq
  %v69 = vshrl.u32 %v68, 7
  %v70 = vlaneseq
  %v71 = vand.u32 %v70, 127
  %v72 = vadd.s32 %v71, 128
  %s73 = smul.u32 0, 8
  %v74 = vstv %s73
  %v75 = vadd.s32 %v74, %v69
  %v76 = vmul.u32 %v75, 256
  %v77 = vadd.s32 %v76, %v71
  %v78 = vadd.s32 %v76, %v72
  %v79 = vmul.u32 %v77, 668265263
  %v80 = vmul.u32 %v78, 668265263
  %s81 = sld [smem:[#allocation3]]
  %s82 = smul.u32 0, 8
  %s83 = smul.u32 0, 4055616968
  %s84 = sadd.s32 %s81, %s83
  %v85 = vstv %s84
  %v86 = vadd.s32 %v79, %v85
  %v87 = vadd.s32 %v80, %v85
  %v88 = vshrl.u32 %v86, 16
  %v89 = vshrl.u32 %v87, 16
  %v90 = vxor.u32 %v86, %v88
  %v91 = vxor.u32 %v87, %v89
  %v92 = vmul.u32 %v90, 2246822507
  %v93 = vmul.u32 %v91, 2246822507
  %v94 = vshrl.u32 %v92, 13
  %v95 = vshrl.u32 %v93, 13
  %v96 = vxor.u32 %v92, %v94
  %v97 = vxor.u32 %v93, %v95
  %v98 = vmul.u32 %v96, 3266489909
  %v99 = vmul.u32 %v97, 3266489909
  %v100 = vshrl.u32 %v98, 16
  %v101 = vshrl.u32 %v99, 16
  %v102 = vxor.u32 %v98, %v100
  %v103 = vxor.u32 %v99, %v101
  %v104 = vshrl.u32 %v102, 8
  %v105 = vshrl.u32 %v103, 8
  %vm106 = vcmp.gt.s32.totalorder %v104, %v28
  %vm107 = vcmp.gt.s32.totalorder %v105, %v29
  %v108 = vsel %vm106, 1, 0
  %v109 = vsel %vm107, 1, 0
  %vm110 = vcmp.gt.s32.totalorder %v104, %v36
  %vm111 = vcmp.gt.s32.totalorder %v105, %v37
  %v112 = vsel %vm110, 1, 0
  %v113 = vsel %vm111, 1, 0
  %v114 = vadd.s32 %v108, %v112
  %v115 = vadd.s32 %v109, %v113
  %vm116 = vcmp.gt.s32.totalorder %v104, %v46
  %vm117 = vcmp.gt.s32.totalorder %v105, %v47
  %v118 = vsel %vm116, 1, 0
  %v119 = vsel %vm117, 1, 0
  %v120 = vadd.s32 %v114, %v118
  %v121 = vadd.s32 %v115, %v119
  %vm122 = vcmp.gt.s32.totalorder %v104, %v56
  %vm123 = vcmp.gt.s32.totalorder %v105, %v57
  %v124 = vsel %vm122, 1, 0
  %v125 = vsel %vm123, 1, 0
  %v126 = vadd.s32 %v120, %v124
  %v127 = vadd.s32 %v121, %v125
  %vm128 = vcmp.gt.s32.totalorder %v104, %v66
  %vm129 = vcmp.gt.s32.totalorder %v105, %v67
  %v130 = vsel %vm128, 1, 0
  %v131 = vsel %vm129, 1, 0
  %v132 = vadd.s32 %v126, %v130
  %v133 = vadd.s32 %v127, %v131
  %v134 = vcvt.s32.f32 %v132
  %v135 = vcvt.s32.f32 %v133
  %v138 = vor.u32 %v134, %v18
  %v139 = vor.u32 %v135, %v19
  %142 = vst [vmem:[%s2] sm:$0xff] %v138
  %143 = vst [vmem:[%s2 + $0x8] sm:$0xff] %v139
  %s144 = sadd.s32 %s82, 1
  %s145 = smul.u32 %s144, 2654435769
  %s146 = sadd.s32 %s81, %s145
  %v147 = vstv %s146
  %v148 = vadd.s32 %v79, %v147
  %v149 = vadd.s32 %v80, %v147
  %v150 = vshrl.u32 %v148, 16
  %v151 = vshrl.u32 %v149, 16
  %v152 = vxor.u32 %v148, %v150
  %v153 = vxor.u32 %v149, %v151
  %v154 = vmul.u32 %v152, 2246822507
  %v155 = vmul.u32 %v153, 2246822507
  %v156 = vshrl.u32 %v154, 13
  %v157 = vshrl.u32 %v155, 13
  %v158 = vxor.u32 %v154, %v156
  %v159 = vxor.u32 %v155, %v157
  %v160 = vmul.u32 %v158, 3266489909
  %v161 = vmul.u32 %v159, 3266489909
  %v162 = vshrl.u32 %v160, 16
  %v163 = vshrl.u32 %v161, 16
  %v164 = vxor.u32 %v160, %v162
  %v165 = vxor.u32 %v161, %v163
  %v166 = vshrl.u32 %v164, 8
  %v167 = vshrl.u32 %v165, 8
  %vm168 = vcmp.gt.s32.totalorder %v166, %v28
  %vm169 = vcmp.gt.s32.totalorder %v167, %v29
  %v170 = vsel %vm168, 1, 0
  %v171 = vsel %vm169, 1, 0
  %vm172 = vcmp.gt.s32.totalorder %v166, %v36
  %vm173 = vcmp.gt.s32.totalorder %v167, %v37
  %v174 = vsel %vm172, 1, 0
  %v175 = vsel %vm173, 1, 0
  %v176 = vadd.s32 %v170, %v174
  %v177 = vadd.s32 %v171, %v175
  %vm178 = vcmp.gt.s32.totalorder %v166, %v46
  %vm179 = vcmp.gt.s32.totalorder %v167, %v47
  %v180 = vsel %vm178, 1, 0
  %v181 = vsel %vm179, 1, 0
  %v182 = vadd.s32 %v176, %v180
  %v183 = vadd.s32 %v177, %v181
  %vm184 = vcmp.gt.s32.totalorder %v166, %v56
  %vm185 = vcmp.gt.s32.totalorder %v167, %v57
  %v186 = vsel %vm184, 1, 0
  %v187 = vsel %vm185, 1, 0
  %v188 = vadd.s32 %v182, %v186
  %v189 = vadd.s32 %v183, %v187
  %vm190 = vcmp.gt.s32.totalorder %v166, %v66
  %vm191 = vcmp.gt.s32.totalorder %v167, %v67
  %v192 = vsel %vm190, 1, 0
  %v193 = vsel %vm191, 1, 0
  %v194 = vadd.s32 %v188, %v192
  %v195 = vadd.s32 %v189, %v193
  %v196 = vcvt.s32.f32 %v194
  %v197 = vcvt.s32.f32 %v195
  %v200 = vor.u32 %v196, %v18
  %v201 = vor.u32 %v197, %v19
  %s204 = scalar_lea.vmem %s2, 16
  %205 = vst [vmem:[%s204] sm:$0xff] %v200
  %206 = vst [vmem:[%s204 + $0x8] sm:$0xff] %v201
  %s207 = sadd.s32 %s82, 2
  %s208 = smul.u32 %s207, 2654435769
  %s209 = sadd.s32 %s81, %s208
  %v210 = vstv %s209
  %v211 = vadd.s32 %v79, %v210
  %v212 = vadd.s32 %v80, %v210
  %v213 = vshrl.u32 %v211, 16
  %v214 = vshrl.u32 %v212, 16
  %v215 = vxor.u32 %v211, %v213
  %v216 = vxor.u32 %v212, %v214
  %v217 = vmul.u32 %v215, 2246822507
  %v218 = vmul.u32 %v216, 2246822507
  %v219 = vshrl.u32 %v217, 13
  %v220 = vshrl.u32 %v218, 13
  %v221 = vxor.u32 %v217, %v219
  %v222 = vxor.u32 %v218, %v220
  %v223 = vmul.u32 %v221, 3266489909
  %v224 = vmul.u32 %v222, 3266489909
  %v225 = vshrl.u32 %v223, 16
  %v226 = vshrl.u32 %v224, 16
  %v227 = vxor.u32 %v223, %v225
  %v228 = vxor.u32 %v224, %v226
  %v229 = vshrl.u32 %v227, 8
  %v230 = vshrl.u32 %v228, 8
  %vm231 = vcmp.gt.s32.totalorder %v229, %v28
  %vm232 = vcmp.gt.s32.totalorder %v230, %v29
  %v233 = vsel %vm231, 1, 0
  %v234 = vsel %vm232, 1, 0
  %vm235 = vcmp.gt.s32.totalorder %v229, %v36
  %vm236 = vcmp.gt.s32.totalorder %v230, %v37
  %v237 = vsel %vm235, 1, 0
  %v238 = vsel %vm236, 1, 0
  %v239 = vadd.s32 %v233, %v237
  %v240 = vadd.s32 %v234, %v238
  %vm241 = vcmp.gt.s32.totalorder %v229, %v46
  %vm242 = vcmp.gt.s32.totalorder %v230, %v47
  %v243 = vsel %vm241, 1, 0
  %v244 = vsel %vm242, 1, 0
  %v245 = vadd.s32 %v239, %v243
  %v246 = vadd.s32 %v240, %v244
  %vm247 = vcmp.gt.s32.totalorder %v229, %v56
  %vm248 = vcmp.gt.s32.totalorder %v230, %v57
  %v249 = vsel %vm247, 1, 0
  %v250 = vsel %vm248, 1, 0
  %v251 = vadd.s32 %v245, %v249
  %v252 = vadd.s32 %v246, %v250
  %vm253 = vcmp.gt.s32.totalorder %v229, %v66
  %vm254 = vcmp.gt.s32.totalorder %v230, %v67
  %v255 = vsel %vm253, 1, 0
  %v256 = vsel %vm254, 1, 0
  %v257 = vadd.s32 %v251, %v255
  %v258 = vadd.s32 %v252, %v256
  %v259 = vcvt.s32.f32 %v257
  %v260 = vcvt.s32.f32 %v258
  %v263 = vor.u32 %v259, %v18
  %v264 = vor.u32 %v260, %v19
  %s267 = scalar_lea.vmem %s2, 32
  %268 = vst [vmem:[%s267] sm:$0xff] %v263
  %269 = vst [vmem:[%s267 + $0x8] sm:$0xff] %v264
  %s270 = sadd.s32 %s82, 3
  %s271 = smul.u32 %s270, 2654435769
  %s272 = sadd.s32 %s81, %s271
  %v273 = vstv %s272
  %v274 = vadd.s32 %v79, %v273
  %v275 = vadd.s32 %v80, %v273
  %v276 = vshrl.u32 %v274, 16
  %v277 = vshrl.u32 %v275, 16
  %v278 = vxor.u32 %v274, %v276
  %v279 = vxor.u32 %v275, %v277
  %v280 = vmul.u32 %v278, 2246822507
  %v281 = vmul.u32 %v279, 2246822507
  %v282 = vshrl.u32 %v280, 13
  %v283 = vshrl.u32 %v281, 13
  %v284 = vxor.u32 %v280, %v282
  %v285 = vxor.u32 %v281, %v283
  %v286 = vmul.u32 %v284, 3266489909
  %v287 = vmul.u32 %v285, 3266489909
  %v288 = vshrl.u32 %v286, 16
  %v289 = vshrl.u32 %v287, 16
  %v290 = vxor.u32 %v286, %v288
  %v291 = vxor.u32 %v287, %v289
  %v292 = vshrl.u32 %v290, 8
  %v293 = vshrl.u32 %v291, 8
  %vm294 = vcmp.gt.s32.totalorder %v292, %v28
  %vm295 = vcmp.gt.s32.totalorder %v293, %v29
  %v296 = vsel %vm294, 1, 0
  %v297 = vsel %vm295, 1, 0
  %vm298 = vcmp.gt.s32.totalorder %v292, %v36
  %vm299 = vcmp.gt.s32.totalorder %v293, %v37
  %v300 = vsel %vm298, 1, 0
  %v301 = vsel %vm299, 1, 0
  %v302 = vadd.s32 %v296, %v300
  %v303 = vadd.s32 %v297, %v301
  %vm304 = vcmp.gt.s32.totalorder %v292, %v46
  %vm305 = vcmp.gt.s32.totalorder %v293, %v47
  %v306 = vsel %vm304, 1, 0
  %v307 = vsel %vm305, 1, 0
  %v308 = vadd.s32 %v302, %v306
  %v309 = vadd.s32 %v303, %v307
  %vm310 = vcmp.gt.s32.totalorder %v292, %v56
  %vm311 = vcmp.gt.s32.totalorder %v293, %v57
  %v312 = vsel %vm310, 1, 0
  %v313 = vsel %vm311, 1, 0
  %v314 = vadd.s32 %v308, %v312
  %v315 = vadd.s32 %v309, %v313
  %vm316 = vcmp.gt.s32.totalorder %v292, %v66
  %vm317 = vcmp.gt.s32.totalorder %v293, %v67
  %v318 = vsel %vm316, 1, 0
  %v319 = vsel %vm317, 1, 0
  %v320 = vadd.s32 %v314, %v318
  %v321 = vadd.s32 %v315, %v319
  %v322 = vcvt.s32.f32 %v320
  %v323 = vcvt.s32.f32 %v321
  %v326 = vor.u32 %v322, %v18
  %v327 = vor.u32 %v323, %v19
  %s330 = scalar_lea.vmem %s2, 48
  %331 = vst [vmem:[%s330] sm:$0xff] %v326
  %332 = vst [vmem:[%s330 + $0x8] sm:$0xff] %v327
  %s333 = sadd.s32 %s82, 4
  %s334 = smul.u32 %s333, 2654435769
  %s335 = sadd.s32 %s81, %s334
  %v336 = vstv %s335
  %v337 = vadd.s32 %v79, %v336
  %v338 = vadd.s32 %v80, %v336
  %v339 = vshrl.u32 %v337, 16
  %v340 = vshrl.u32 %v338, 16
  %v341 = vxor.u32 %v337, %v339
  %v342 = vxor.u32 %v338, %v340
  %v343 = vmul.u32 %v341, 2246822507
  %v344 = vmul.u32 %v342, 2246822507
  %v345 = vshrl.u32 %v343, 13
  %v346 = vshrl.u32 %v344, 13
  %v347 = vxor.u32 %v343, %v345
  %v348 = vxor.u32 %v344, %v346
  %v349 = vmul.u32 %v347, 3266489909
  %v350 = vmul.u32 %v348, 3266489909
  %v351 = vshrl.u32 %v349, 16
  %v352 = vshrl.u32 %v350, 16
  %v353 = vxor.u32 %v349, %v351
  %v354 = vxor.u32 %v350, %v352
  %v355 = vshrl.u32 %v353, 8
  %v356 = vshrl.u32 %v354, 8
  %vm357 = vcmp.gt.s32.totalorder %v355, %v28
  %vm358 = vcmp.gt.s32.totalorder %v356, %v29
  %v359 = vsel %vm357, 1, 0
  %v360 = vsel %vm358, 1, 0
  %vm361 = vcmp.gt.s32.totalorder %v355, %v36
  %vm362 = vcmp.gt.s32.totalorder %v356, %v37
  %v363 = vsel %vm361, 1, 0
  %v364 = vsel %vm362, 1, 0
  %v365 = vadd.s32 %v359, %v363
  %v366 = vadd.s32 %v360, %v364
  %vm367 = vcmp.gt.s32.totalorder %v355, %v46
  %vm368 = vcmp.gt.s32.totalorder %v356, %v47
  %v369 = vsel %vm367, 1, 0
  %v370 = vsel %vm368, 1, 0
  %v371 = vadd.s32 %v365, %v369
  %v372 = vadd.s32 %v366, %v370
  %vm373 = vcmp.gt.s32.totalorder %v355, %v56
  %vm374 = vcmp.gt.s32.totalorder %v356, %v57
  %v375 = vsel %vm373, 1, 0
  %v376 = vsel %vm374, 1, 0
  %v377 = vadd.s32 %v371, %v375
  %v378 = vadd.s32 %v372, %v376
  %vm379 = vcmp.gt.s32.totalorder %v355, %v66
  %vm380 = vcmp.gt.s32.totalorder %v356, %v67
  %v381 = vsel %vm379, 1, 0
  %v382 = vsel %vm380, 1, 0
  %v383 = vadd.s32 %v377, %v381
  %v384 = vadd.s32 %v378, %v382
  %v385 = vcvt.s32.f32 %v383
  %v386 = vcvt.s32.f32 %v384
  %v389 = vor.u32 %v385, %v18
  %v390 = vor.u32 %v386, %v19
  %s393 = scalar_lea.vmem %s2, 64
  %394 = vst [vmem:[%s393] sm:$0xff] %v389
  %395 = vst [vmem:[%s393 + $0x8] sm:$0xff] %v390
  %s396 = sadd.s32 %s82, 5
  %s397 = smul.u32 %s396, 2654435769
  %s398 = sadd.s32 %s81, %s397
  %v399 = vstv %s398
  %v400 = vadd.s32 %v79, %v399
  %v401 = vadd.s32 %v80, %v399
  %v402 = vshrl.u32 %v400, 16
  %v403 = vshrl.u32 %v401, 16
  %v404 = vxor.u32 %v400, %v402
  %v405 = vxor.u32 %v401, %v403
  %v406 = vmul.u32 %v404, 2246822507
  %v407 = vmul.u32 %v405, 2246822507
  %v408 = vshrl.u32 %v406, 13
  %v409 = vshrl.u32 %v407, 13
  %v410 = vxor.u32 %v406, %v408
  %v411 = vxor.u32 %v407, %v409
  %v412 = vmul.u32 %v410, 3266489909
  %v413 = vmul.u32 %v411, 3266489909
  %v414 = vshrl.u32 %v412, 16
  %v415 = vshrl.u32 %v413, 16
  %v416 = vxor.u32 %v412, %v414
  %v417 = vxor.u32 %v413, %v415
  %v418 = vshrl.u32 %v416, 8
  %v419 = vshrl.u32 %v417, 8
  %vm420 = vcmp.gt.s32.totalorder %v418, %v28
  %vm421 = vcmp.gt.s32.totalorder %v419, %v29
  %v422 = vsel %vm420, 1, 0
  %v423 = vsel %vm421, 1, 0
  %vm424 = vcmp.gt.s32.totalorder %v418, %v36
  %vm425 = vcmp.gt.s32.totalorder %v419, %v37
  %v426 = vsel %vm424, 1, 0
  %v427 = vsel %vm425, 1, 0
  %v428 = vadd.s32 %v422, %v426
  %v429 = vadd.s32 %v423, %v427
  %vm430 = vcmp.gt.s32.totalorder %v418, %v46
  %vm431 = vcmp.gt.s32.totalorder %v419, %v47
  %v432 = vsel %vm430, 1, 0
  %v433 = vsel %vm431, 1, 0
  %v434 = vadd.s32 %v428, %v432
  %v435 = vadd.s32 %v429, %v433
  %vm436 = vcmp.gt.s32.totalorder %v418, %v56
  %vm437 = vcmp.gt.s32.totalorder %v419, %v57
  %v438 = vsel %vm436, 1, 0
  %v439 = vsel %vm437, 1, 0
  %v440 = vadd.s32 %v434, %v438
  %v441 = vadd.s32 %v435, %v439
  %vm442 = vcmp.gt.s32.totalorder %v418, %v66
  %vm443 = vcmp.gt.s32.totalorder %v419, %v67
  %v444 = vsel %vm442, 1, 0
  %v445 = vsel %vm443, 1, 0
  %v446 = vadd.s32 %v440, %v444
  %v447 = vadd.s32 %v441, %v445
  %v448 = vcvt.s32.f32 %v446
  %v449 = vcvt.s32.f32 %v447
  %v452 = vor.u32 %v448, %v18
  %v453 = vor.u32 %v449, %v19
  %s456 = scalar_lea.vmem %s2, 80
  %457 = vst [vmem:[%s456] sm:$0xff] %v452
  %458 = vst [vmem:[%s456 + $0x8] sm:$0xff] %v453
  %s459 = sadd.s32 %s82, 6
  %s460 = smul.u32 %s459, 2654435769
  %s461 = sadd.s32 %s81, %s460
  %v462 = vstv %s461
  %v463 = vadd.s32 %v79, %v462
  %v464 = vadd.s32 %v80, %v462
  %v465 = vshrl.u32 %v463, 16
  %v466 = vshrl.u32 %v464, 16
  %v467 = vxor.u32 %v463, %v465
  %v468 = vxor.u32 %v464, %v466
  %v469 = vmul.u32 %v467, 2246822507
  %v470 = vmul.u32 %v468, 2246822507
  %v471 = vshrl.u32 %v469, 13
  %v472 = vshrl.u32 %v470, 13
  %v473 = vxor.u32 %v469, %v471
  %v474 = vxor.u32 %v470, %v472
  %v475 = vmul.u32 %v473, 3266489909
  %v476 = vmul.u32 %v474, 3266489909
  %v477 = vshrl.u32 %v475, 16
  %v478 = vshrl.u32 %v476, 16
  %v479 = vxor.u32 %v475, %v477
  %v480 = vxor.u32 %v476, %v478
  %v481 = vshrl.u32 %v479, 8
  %v482 = vshrl.u32 %v480, 8
  %vm483 = vcmp.gt.s32.totalorder %v481, %v28
  %vm484 = vcmp.gt.s32.totalorder %v482, %v29
  %v485 = vsel %vm483, 1, 0
  %v486 = vsel %vm484, 1, 0
  %vm487 = vcmp.gt.s32.totalorder %v481, %v36
  %vm488 = vcmp.gt.s32.totalorder %v482, %v37
  %v489 = vsel %vm487, 1, 0
  %v490 = vsel %vm488, 1, 0
  %v491 = vadd.s32 %v485, %v489
  %v492 = vadd.s32 %v486, %v490
  %vm493 = vcmp.gt.s32.totalorder %v481, %v46
  %vm494 = vcmp.gt.s32.totalorder %v482, %v47
  %v495 = vsel %vm493, 1, 0
  %v496 = vsel %vm494, 1, 0
  %v497 = vadd.s32 %v491, %v495
  %v498 = vadd.s32 %v492, %v496
  %vm499 = vcmp.gt.s32.totalorder %v481, %v56
  %vm500 = vcmp.gt.s32.totalorder %v482, %v57
  %v501 = vsel %vm499, 1, 0
  %v502 = vsel %vm500, 1, 0
  %v503 = vadd.s32 %v497, %v501
  %v504 = vadd.s32 %v498, %v502
  %vm505 = vcmp.gt.s32.totalorder %v481, %v66
  %vm506 = vcmp.gt.s32.totalorder %v482, %v67
  %v507 = vsel %vm505, 1, 0
  %v508 = vsel %vm506, 1, 0
  %v509 = vadd.s32 %v503, %v507
  %v510 = vadd.s32 %v504, %v508
  %v511 = vcvt.s32.f32 %v509
  %v512 = vcvt.s32.f32 %v510
  %v515 = vor.u32 %v511, %v18
  %v516 = vor.u32 %v512, %v19
  %s519 = scalar_lea.vmem %s2, 96
  %520 = vst [vmem:[%s519] sm:$0xff] %v515
  %521 = vst [vmem:[%s519 + $0x8] sm:$0xff] %v516
  %s522 = sadd.s32 %s82, 7
  %s523 = smul.u32 %s522, 2654435769
  %s524 = sadd.s32 %s81, %s523
  %v525 = vstv %s524
  %v526 = vadd.s32 %v79, %v525
  %v527 = vadd.s32 %v80, %v525
  %v528 = vshrl.u32 %v526, 16
  %v529 = vshrl.u32 %v527, 16
  %v530 = vxor.u32 %v526, %v528
  %v531 = vxor.u32 %v527, %v529
  %v532 = vmul.u32 %v530, 2246822507
  %v533 = vmul.u32 %v531, 2246822507
  %v534 = vshrl.u32 %v532, 13
  %v535 = vshrl.u32 %v533, 13
  %v536 = vxor.u32 %v532, %v534
  %v537 = vxor.u32 %v533, %v535
  %v538 = vmul.u32 %v536, 3266489909
  %v539 = vmul.u32 %v537, 3266489909
  %v540 = vshrl.u32 %v538, 16
  %v541 = vshrl.u32 %v539, 16
  %v542 = vxor.u32 %v538, %v540
  %v543 = vxor.u32 %v539, %v541
  %v544 = vshrl.u32 %v542, 8
  %v545 = vshrl.u32 %v543, 8
  %vm546 = vcmp.gt.s32.totalorder %v544, %v28
  %vm547 = vcmp.gt.s32.totalorder %v545, %v29
  %v548 = vsel %vm546, 1, 0
  %v549 = vsel %vm547, 1, 0
  %vm550 = vcmp.gt.s32.totalorder %v544, %v36
  %vm551 = vcmp.gt.s32.totalorder %v545, %v37
  %v552 = vsel %vm550, 1, 0
  %v553 = vsel %vm551, 1, 0
  %v554 = vadd.s32 %v548, %v552
  %v555 = vadd.s32 %v549, %v553
  %vm556 = vcmp.gt.s32.totalorder %v544, %v46
  %vm557 = vcmp.gt.s32.totalorder %v545, %v47
  %v558 = vsel %vm556, 1, 0
  %v559 = vsel %vm557, 1, 0
  %v560 = vadd.s32 %v554, %v558
  %v561 = vadd.s32 %v555, %v559
  %vm562 = vcmp.gt.s32.totalorder %v544, %v56
  %vm563 = vcmp.gt.s32.totalorder %v545, %v57
  %v564 = vsel %vm562, 1, 0
  %v565 = vsel %vm563, 1, 0
  %v566 = vadd.s32 %v560, %v564
  %v567 = vadd.s32 %v561, %v565
  %vm568 = vcmp.gt.s32.totalorder %v544, %v66
  %vm569 = vcmp.gt.s32.totalorder %v545, %v67
  %v570 = vsel %vm568, 1, 0
  %v571 = vsel %vm569, 1, 0
  %v572 = vadd.s32 %v566, %v570
  %v573 = vadd.s32 %v567, %v571
  %v574 = vcvt.s32.f32 %v572
  %v575 = vcvt.s32.f32 %v573
  %v578 = vor.u32 %v574, %v18
  %v579 = vor.u32 %v575, %v19
  %s582 = scalar_lea.vmem %s2, 112
  %583 = vst [vmem:[%s582] sm:$0xff] %v578
  %584 = vst [vmem:[%s582 + $0x8] sm:$0xff] %v579
  // Predicated region
  $region6: #{signed_poisson_encode.1} parent=0 // pred_check
    _
  $region7: #{signed_poisson_encode.1} parent=0 // pred_check_branch
    %586 = sbr.rel (0) target = $region9
  $region8: #{signed_poisson_encode.1} parent=0 // pred_region
    _
  $region9: #{signed_poisson_encode.1} parent=0 // pred_fallthru
    _
  // Predicated region
  $region10: #{signed_poisson_encode.1} parent=0 // pred_check
    _
  $region11: #{signed_poisson_encode.1} parent=0 // pred_check_branch
    %588 = sbr.rel (0) target = $region13
  $region12: #{signed_poisson_encode.1} parent=0 // pred_region
    _
  $region13: #{signed_poisson_encode.1} parent=0 // pred_fallthru
    _

</llo_original>
